<compile_context>
chip_gen: v7x
topology: tpu7x:2x2x1
jax: 0.10.0
libtpu: 0.0.40
codegen_flags: <defaults>
</compile_context>

<pallas_src>
import functools

import jax
import jax.numpy as jnp
from jax.experimental import pallas as pl
from jax.experimental.pallas import tpu as pltpu

_MIB = 1024 * 1024


def _round_up(a, b):
    return ((a + b - 1) // b) * b


def _vmem_budget_bytes():
    """Generation-aware VMEM budget for this pallas_call."""
    cap = 64 * _MIB  # conservative fallback (v7x physical VMEM)
    try:
        cap = int(pltpu.get_tpu_info().vmem_capacity_bytes)
    except Exception:
        pass
    return max(32 * _MIB, min(cap - 8 * _MIB, 96 * _MIB))


def _choose_tiling(rows, lane, itemsize, vmem_budget):
    """Pick (tile_rows, chunk_rows) for a (rows, lane) slab."""
    # Row chunk for the in-kernel loop: keeps each full-width f32 temporary at
    # <= ~1 MiB no matter how big the DMA block is.  Multiple of 32 so
    # bf16/int8 sublane tiles never force a relayout.
    chunk = (_MIB // (lane * 4)) // 32 * 32
    chunk = max(32, min(256, chunk))
    chunk = min(chunk, max(32, _round_up(rows, 32)))

    # DMA block: 2x-in + 2x-out double buffers (4 * block bytes) plus a few
    # MiB of chunked temporaries must fit the budget.  The ~0.35us per-step
    # pipeline overhead is the only non-HBM cost, so bigger blocks amortize it.
    target_block_bytes = min(16 * _MIB, (vmem_budget - 8 * _MIB) // 4)
    n_chunks = max(1, target_block_bytes // (chunk * lane * itemsize))
    tile = chunk * int(n_chunks)
    tile = min(tile, _round_up(rows, chunk))

    # Prefer >= 2 grid steps when there is enough work so the "parallel" axis
    # can shard across TensorCores on megacore parts (v7x); costs at most one
    # extra ~0.35us step on single-TC chips.
    if rows > chunk and pl.cdiv(rows, tile) < 2:
        tile = _round_up(pl.cdiv(rows, 2), chunk)
    return tile, chunk


def _plain_kernel(x_ref, w_ref, o_ref, *, inv_c, chunk_rows, num_chunks):
    """Plain path: lane dim == C (no packing). One-pass biased variance in f32."""
    w = w_ref[...].astype(jnp.float32)                            # (1, C)

    def process(r0):
        x = x_ref[pl.ds(r0, chunk_rows), :].astype(jnp.float32)   # (chunk, C)
        s1 = jnp.sum(x, axis=-1, keepdims=True)
        s2 = jnp.sum(x * x, axis=-1, keepdims=True)
        mean = s1 * inv_c
        var = jnp.maximum(s2 * inv_c - mean * mean, 0.0)
        inv = jax.lax.rsqrt(var + 1e-5)
        o_ref[pl.ds(r0, chunk_rows), :] = (x * inv * w).astype(o_ref.dtype)

    if num_chunks == 1:
        process(0)
    else:
        def body(ci, carry):
            process(pl.multiple_of(ci * chunk_rows, chunk_rows))
            return carry
        jax.lax.fori_loop(0, num_chunks, body, 0)


def _packed_kernel(x_ref, w_ref, bsum_ref, o_ref, *, inv_c, chunk_rows, num_chunks):
    """Lane-dense path for small C: each L = k*C wide row packs k independent
    channel groups.  bsum is the (L, L) block-diagonal 0/1 matrix
    (bsum[i, j] = 1 iff i // C == j // C), so `x @ bsum` puts, in every lane,
    the sum over that lane's own C-group (segmented reduce + broadcast in one
    lane-dense MXU pass — the MXU is otherwise idle in this kernel)."""
    w = w_ref[...].astype(jnp.float32)                            # (1, L)
    bsum = bsum_ref[...]                                          # (L, L) bf16 0/1

    def segsum(a):
        # Two-term bf16 hi/lo split of the LHS: single-pass bf16 MXU matmuls
        # (cheap on every generation) with ~f32-accurate sums, since the 0/1
        # RHS is exactly representable in bf16.
        hi = a.astype(jnp.bfloat16)
        lo = (a - hi.astype(jnp.float32)).astype(jnp.bfloat16)
        return (jnp.dot(hi, bsum, preferred_element_type=jnp.float32)
                + jnp.dot(lo, bsum, preferred_element_type=jnp.float32))

    def process(r0):
        x = x_ref[pl.ds(r0, chunk_rows), :].astype(jnp.float32)   # (chunk, L)
        s1 = segsum(x)
        s2 = segsum(x * x)
        mean = s1 * inv_c
        var = jnp.maximum(s2 * inv_c - mean * mean, 0.0)
        inv = jax.lax.rsqrt(var + 1e-5)                           # const per C-group
        o_ref[pl.ds(r0, chunk_rows), :] = (x * inv * w).astype(o_ref.dtype)

    if num_chunks == 1:
        process(0)
    else:
        def body(ci, carry):
            process(pl.multiple_of(ci * chunk_rows, chunk_rows))
            return carry
        jax.lax.fori_loop(0, num_chunks, body, 0)


def biasfree_layernorm(x, weight):
    """x: (..., C), weight: (C,). Returns same shape/dtype as x."""
    orig_shape = x.shape
    C = int(orig_shape[-1])
    assert weight.shape == (C,), (weight.shape, C)
    R = 1
    for d in orig_shape[:-1]:
        R *= int(d)

    x2d = x.reshape(R, C)

    # Lane packing for small C: k channel groups share the 128-lane axis
    # (works for any C < 128, a few dead lanes when C does not divide 128).
    k = max(1, 128 // C) if C < 128 else 1
    L = k * C

    pad_rows = (-R) % k
    if pad_rows:
        # TODO(synk): rare tail case (R % k != 0) still costs one pad + one
        # slice HBM pass; could be avoided by routing the tail rows through
        # the plain (unpacked) path instead.
        x2d = jnp.pad(x2d, ((0, pad_rows), (0, 0)))
    rows_packed = (R + pad_rows) // k
    xp = x2d.reshape(rows_packed, L)                  # free (contiguous) reshape

    itemsize = int(jnp.dtype(x.dtype).itemsize)
    budget = _vmem_budget_bytes()
    tile_r, chunk_rows = _choose_tiling(rows_packed, L, itemsize, budget)
    num_chunks = tile_r // chunk_rows
    grid = (pl.cdiv(rows_packed, tile_r),)            # last block may be partial

    wp = jnp.tile(weight.reshape(1, C), (1, k))       # (1, L), resident every step

    mm_flops = 8 * rows_packed * L * L if k > 1 else 0
    cost = pl.CostEstimate(
        flops=int(6 * R * C + mm_flops),
        transcendentals=int(R),
        bytes_accessed=int(2 * R * C * itemsize
                           + C * jnp.dtype(weight.dtype).itemsize),
    )
    cparams = pltpu.CompilerParams(
        dimension_semantics=("parallel",),
        vmem_limit_bytes=int(budget),
    )

    x_spec = pl.BlockSpec((tile_r, L), lambda i: (i, 0))
    w_spec = pl.BlockSpec((1, L), lambda i: (0, 0))
    o_spec = pl.BlockSpec((tile_r, L), lambda i: (i, 0))
    out_shape = jax.ShapeDtypeStruct((rows_packed, L), x.dtype)

    if k == 1:
        out = pl.pallas_call(
            functools.partial(_plain_kernel, inv_c=1.0 / C,
                              chunk_rows=chunk_rows, num_chunks=num_chunks),
            out_shape=out_shape,
            grid_spec=pltpu.PrefetchScalarGridSpec(
                num_scalar_prefetch=0, grid=grid,
                in_specs=[x_spec, w_spec], out_specs=o_spec),
            compiler_params=cparams,
            cost_estimate=cost,
        )(xp, wp)
    else:
        group = jnp.arange(L, dtype=jnp.int32) // C
        bsum = (group[:, None] == group[None, :]).astype(jnp.bfloat16)  # (L, L)
        out = pl.pallas_call(
            functools.partial(_packed_kernel, inv_c=1.0 / C,
                              chunk_rows=chunk_rows, num_chunks=num_chunks),
            out_shape=out_shape,
            grid_spec=pltpu.PrefetchScalarGridSpec(
                num_scalar_prefetch=0, grid=grid,
                in_specs=[x_spec, w_spec, pl.BlockSpec((L, L), lambda i: (0, 0))],
                out_specs=o_spec),
            compiler_params=cparams,
            cost_estimate=cost,
        )(xp, wp, bsum)

    out = out.reshape(rows_packed * k, C)             # free reshape
    if pad_rows:
        out = out[:R]
    return out.reshape(orig_shape)


def _reference(x, w):
    x = x.astype(jnp.float32)
    mu = jnp.mean(x, axis=-1, keepdims=True)
    sigma = jnp.mean((x - mu) ** 2, axis=-1, keepdims=True)   # unbiased=False
    return x / jnp.sqrt(sigma + 1e-5) * w.astype(jnp.float32)


if __name__ == "__main__":
    key = jax.random.PRNGKey(0)
    k0, k1, k2, k3, k4 = jax.random.split(key, 5)

    # 1) Packed path, C divides 128: (B, H*W, C) as fed to this LayerNorm.
    B, H, W, C = 2, 16, 16, 32
    x = 0.5 + jax.random.normal(k0, (B, H * W, C), dtype=jnp.float32)
    w = 1.0 + 0.1 * jax.random.normal(k1, (C,), dtype=jnp.float32)
    out = jax.block_until_ready(biasfree_layernorm(x, w))
    assert out.shape == x.shape and out.dtype == x.dtype
    err = float(jnp.max(jnp.abs(out - _reference(x, w))))
    assert err < 3e-4, ("packed/C=32", err)

    # 2) Plain path, rows not a multiple of the tile -> partial (masked) block.
    x2 = jax.random.normal(k2, (3, 37, 128), dtype=jnp.float32)
    w2 = 1.0 + 0.05 * jax.random.normal(k3, (128,), dtype=jnp.float32)
    out2 = jax.block_until_ready(biasfree_layernorm(x2, w2))
    err2 = float(jnp.max(jnp.abs(out2 - _reference(x2, w2))))
    assert err2 < 1e-4, ("plain/C=128", err2)

    # 3) Packed path with C=48 (does not divide 128 -> k=2, 96 live lanes).
    x3 = jax.random.normal(k4, (2, 64, 48), dtype=jnp.float32)
    w3 = jnp.linspace(0.5, 1.5, 48, dtype=jnp.float32)
    out3 = jax.block_until_ready(biasfree_layernorm(x3, w3))
    err3 = float(jnp.max(jnp.abs(out3 - _reference(x3, w3))))
    assert err3 < 3e-4, ("packed/C=48", err3)

    # 4) bf16 input exercises dtype-aware tiling; tolerance is bf16 rounding.
    x4 = jax.random.normal(k0, (2, 200, 64), dtype=jnp.bfloat16)
    w4 = jnp.ones((64,), dtype=jnp.float32)
    out4 = jax.block_until_ready(biasfree_layernorm(x4, w4))
    ref4 = _reference(x4.astype(jnp.float32), w4)
    err4 = float(jnp.max(jnp.abs(out4.astype(jnp.float32) - ref4)))
    assert out4.dtype == x4.dtype
    assert err4 < 5e-2, ("packed/bf16", err4)

    print("KERNEL_OK")
</pallas_src>

<mosaic_0001>
module attributes {stable_mosaic.version = 11 : i64} {
  func.func @_packed_kernel(%arg0: i32, %arg1: memref<128x128xf32, #tpu.memory_space<vmem>>, %arg2: memref<1x128xf32, #tpu.memory_space<vmem>>, %arg3: memref<128x128xbf16, #tpu.memory_space<vmem>>, %arg4: memref<128x128xf32, #tpu.memory_space<vmem>>) attributes {dimension_semantics = [#tpu.dimension_semantics<parallel>], iteration_bounds = array<i64: 1>, scalar_prefetch = 0 : i64, scratch_operands = 0 : i64, tpu.core_type = #tpu.core_type<tc>, window_params = [{transform_indices = @transform_0, window_bounds = array<i64: 128, 128>}, {pipeline_mode = #tpu.pipeline_mode<synchronous>, transform_indices = @transform_1, window_bounds = array<i64: 1, 128>}, {pipeline_mode = #tpu.pipeline_mode<synchronous>, transform_indices = @transform_2, window_bounds = array<i64: 128, 128>}, {transform_indices = @transform_3, window_bounds = array<i64: 128, 128>}]} {
    %c0 = arith.constant 0 : index
    %c0_0 = arith.constant 0 : index
    %0 = vector.load %arg2[%c0, %c0_0] : memref<1x128xf32, #tpu.memory_space<vmem>>, vector<1x128xf32>
    %c0_1 = arith.constant 0 : index
    %c0_2 = arith.constant 0 : index
    %1 = vector.load %arg3[%c0_1, %c0_2] : memref<128x128xbf16, #tpu.memory_space<vmem>>, vector<128x128xbf16>
    %c0_3 = arith.constant 0 : index
    %c0_4 = arith.constant 0 : index
    %2 = vector.load %arg1[%c0_3, %c0_4] : memref<128x128xf32, #tpu.memory_space<vmem>>, vector<128x128xf32>
    %3 = arith.truncf %2 : vector<128x128xf32> to vector<128x128xbf16>
    %4 = arith.extf %3 : vector<128x128xbf16> to vector<128x128xf32>
    %5 = arith.subf %2, %4 : vector<128x128xf32>
    %6 = arith.truncf %5 : vector<128x128xf32> to vector<128x128xbf16>
    %cst = arith.constant dense<0.000000e+00> : vector<128x128xf32>
    %7 = tpu.matmul %3, %1, %cst {dimension_numbers = #tpu.dot_dimension_numbers<[1], [0], [0], [1], [0, 0, 1, 1], [], []>} : vector<128x128xbf16>, vector<128x128xbf16>, vector<128x128xf32> -> vector<128x128xf32>
    %cst_5 = arith.constant dense<0.000000e+00> : vector<128x128xf32>
    %8 = tpu.matmul %6, %1, %cst_5 {dimension_numbers = #tpu.dot_dimension_numbers<[1], [0], [0], [1], [0, 0, 1, 1], [], []>} : vector<128x128xbf16>, vector<128x128xbf16>, vector<128x128xf32> -> vector<128x128xf32>
    %9 = arith.addf %7, %8 : vector<128x128xf32>
    %10 = arith.mulf %2, %2 : vector<128x128xf32>
    %11 = arith.truncf %10 : vector<128x128xf32> to vector<128x128xbf16>
    %12 = arith.extf %11 : vector<128x128xbf16> to vector<128x128xf32>
    %13 = arith.subf %10, %12 : vector<128x128xf32>
    %14 = arith.truncf %13 : vector<128x128xf32> to vector<128x128xbf16>
    %cst_6 = arith.constant dense<0.000000e+00> : vector<128x128xf32>
    %15 = tpu.matmul %11, %1, %cst_6 {dimension_numbers = #tpu.dot_dimension_numbers<[1], [0], [0], [1], [0, 0, 1, 1], [], []>} : vector<128x128xbf16>, vector<128x128xbf16>, vector<128x128xf32> -> vector<128x128xf32>
    %cst_7 = arith.constant dense<0.000000e+00> : vector<128x128xf32>
    %16 = tpu.matmul %14, %1, %cst_7 {dimension_numbers = #tpu.dot_dimension_numbers<[1], [0], [0], [1], [0, 0, 1, 1], [], []>} : vector<128x128xbf16>, vector<128x128xbf16>, vector<128x128xf32> -> vector<128x128xf32>
    %17 = arith.addf %15, %16 : vector<128x128xf32>
    %cst_8 = arith.constant 3.125000e-02 : f32
    %18 = vector.broadcast %cst_8 : f32 to vector<128x128xf32>
    %19 = arith.mulf %9, %18 : vector<128x128xf32>
    %cst_9 = arith.constant 3.125000e-02 : f32
    %20 = vector.broadcast %cst_9 : f32 to vector<128x128xf32>
    %21 = arith.mulf %17, %20 : vector<128x128xf32>
    %22 = arith.mulf %19, %19 : vector<128x128xf32>
    %23 = arith.subf %21, %22 : vector<128x128xf32>
    %cst_10 = arith.constant 0.000000e+00 : f32
    %24 = vector.broadcast %cst_10 : f32 to vector<128x128xf32>
    %25 = arith.maximumf %23, %24 : vector<128x128xf32>
    %cst_11 = arith.constant 9.99999974E-6 : f32
    %26 = vector.broadcast %cst_11 : f32 to vector<128x128xf32>
    %27 = arith.addf %25, %26 : vector<128x128xf32>
    %28 = math.rsqrt %27 : vector<128x128xf32>
    %29 = arith.mulf %2, %28 : vector<128x128xf32>
    %30 = vector.broadcast %0 : vector<1x128xf32> to vector<128x128xf32>
    %31 = arith.mulf %29, %30 : vector<128x128xf32>
    %c0_12 = arith.constant 0 : index
    %c0_13 = arith.constant 0 : index
    %32 = vector.load %arg4[%c0_12, %c0_13] : memref<128x128xf32, #tpu.memory_space<vmem>>, vector<128x128xf32>
    tpu.vector_store %arg4[%c0_12, %c0_13], %31 {strides = array<i32>} : memref<128x128xf32, #tpu.memory_space<vmem>>, vector<128x128xf32>,
    return
  }
  func.func @transform_0(%arg0: i32) -> (i32, i32) {
    %c0_i32 = arith.constant 0 : i32
    %c0_i32_0 = arith.constant 0 : i32
    return %arg0, %c0_i32 : i32, i32
  }
  func.func @transform_1(%arg0: i32) -> (i32, i32) {
    %c0_i32 = arith.constant 0 : i32
    %c0_i32_0 = arith.constant 0 : i32
    %c0_i32_1 = arith.constant 0 : i32
    return %c0_i32, %c0_i32_0 : i32, i32
  }
  func.func @transform_2(%arg0: i32) -> (i32, i32) {
    %c0_i32 = arith.constant 0 : i32
    %c0_i32_0 = arith.constant 0 : i32
    %c0_i32_1 = arith.constant 0 : i32
    return %c0_i32, %c0_i32_0 : i32, i32
  }
  func.func @transform_3(%arg0: i32) -> (i32, i32) {
    %c0_i32 = arith.constant 0 : i32
    %c0_i32_0 = arith.constant 0 : i32
    return %arg0, %c0_i32 : i32, i32
  }
}

</mosaic_0001>

<llo_original>
// kernel: tpu_custom_call.1
$region0: #{tpu_custom_call.1}
  #allocation0 [shape = 'u32[]', space=smem, size = 0x4, offset = 0x4, fixed_abs, tag = 'smem constant byte address 0x4 - core index']
  #allocation1 [shape = 'u32[144,128]{1,0:T(1,128)}', space=vmem, size = 0x12000, scoped, tag = 'internal scratch']
  %s0 = inlined_call_operand.hbm [shape: f32[128,128], index: 0, kind: input, shape index: {}]
  %s1 = inlined_call_operand.vmem [shape: f32[1,128], index: 1, kind: input, shape index: {}]
  %s2 = inlined_call_operand.hbm [shape: bf16[128,128], index: 2, kind: input, shape index: {}]
  %s3 = inlined_call_operand.hbm [shape: f32[128,128], index: 3, kind: output, shape index: {}]
  %s4 = sld [smem:[#allocation0]]
  $region30: #{tpu_custom_call.1} parent=0
    _
  %s6 = ssub.s32 1, %s4
  %s7 = scalar_select 0, %s6, %s4
  $region1: #{tpu_custom_call.1} parent=0
    #allocation2 [shape = 'u8[65536]{0}', space=vmem, size = 0x10000, scoped, tag = 'input window, operand 0, single buffered']
    #allocation3 [shape = 's32[1]{0}', space=sflag, size = 0x4, scoped, tag = 'scoped memory for tpu_custom_call.1']
    #allocation4 [shape = 's32[1]{0}', space=sflag, size = 0x4, scoped, tag = 'scoped memory for tpu_custom_call.1']
    #allocation5 [shape = 'u8[32768]{0}', space=vmem, size = 0x8000, scoped, tag = 'input window, operand 2, single buffered']
    #allocation6 [shape = 's32[1]{0}', space=sflag, size = 0x4, scoped, tag = 'scoped memory for tpu_custom_call.1']
    #allocation7 [shape = 'u8[65536]{0}', space=vmem, size = 0x10000, scoped, tag = 'output window, operand 0, single buffered']
    %8 = vsyncpa [#allocation3], 0
    %9 = vsyncpa [#allocation6], 0
    %10 = vsyncpa [#allocation4], 0
    // Predicated region
    $region2: #{tpu_custom_call.1} parent=1 // pred_check
      _
    $region3: #{tpu_custom_call.1} parent=1 // pred_check_branch
      %12 = sbr.rel (0) target = $region5
    $region4: #{tpu_custom_call.1} parent=1 // pred_region
      %s14 = ssub.s32 2048, 2048
      %15 = vsyncadd [#allocation3], %s14
      %s16 = sshll.u32 [#allocation2], 4
      %s17 = int_to_ptr.vmem [resolvable:$true] %s16
      %22 = dma.hbm_to_vmem [thread:$0]  %s0, 2048, %s17, [#allocation3], 128, 128, 8
    $region5: #{tpu_custom_call.1} parent=1 // pred_fallthru
      _
    // Predicated region
    $region6: #{tpu_custom_call.1} parent=1 // pred_check
      _
    $region7: #{tpu_custom_call.1} parent=1 // pred_check_branch
      %24 = sbr.rel (0) target = $region9
    $region8: #{tpu_custom_call.1} parent=1 // pred_region
      _
    $region9: #{tpu_custom_call.1} parent=1 // pred_fallthru
      _
    // Predicated region
    $region10: #{tpu_custom_call.1} parent=1 // pred_check
      _
    $region11: #{tpu_custom_call.1} parent=1 // pred_check_branch
      %26 = sbr.rel (0) target = $region13
    $region12: #{tpu_custom_call.1} parent=1 // pred_region
      %s28 = ssub.s32 1024, 1024
      %29 = vsyncadd [#allocation6], %s28
      %s30 = sshll.u32 [#allocation5], 4
      %s31 = int_to_ptr.vmem [resolvable:$true] %s30
      %36 = dma.hbm_to_vmem [thread:$0]  %s2, 1024, %s31, [#allocation6], 64, 64, 4
    $region13: #{tpu_custom_call.1} parent=1 // pred_fallthru
      _
    // Predicated region
    $region14: #{tpu_custom_call.1} parent=1 // pred_check
      _
    $region15: #{tpu_custom_call.1} parent=1 // pred_check_branch
      %38 = sbr.rel (0) target = $region17
    $region16: #{tpu_custom_call.1} parent=1 // pred_region
      %39 = dma.done [#allocation3], 2048
    $region17: #{tpu_custom_call.1} parent=1 // pred_fallthru
      _
    // Predicated region
    $region18: #{tpu_custom_call.1} parent=1 // pred_check
      _
    $region19: #{tpu_custom_call.1} parent=1 // pred_check_branch
      %41 = sbr.rel (0) target = $region21
    $region20: #{tpu_custom_call.1} parent=1 // pred_region
      %42 = dma.done [#allocation6], 1024
    $region21: #{tpu_custom_call.1} parent=1 // pred_fallthru
      _
    %v44 = vld [vmem:[%s1] sm:$0x1]
    %v45 = vld [vmem:[#allocation5] sm:$0xf]
    %v46 = vld [vmem:[#allocation5 + $0x4] sm:$0xf]
    %v47 = vld [vmem:[#allocation5 + $0x8] sm:$0xf]
    %v48 = vld [vmem:[#allocation5 + $0xc] sm:$0xf]
    %v49 = vld [vmem:[#allocation5 + $0x10] sm:$0xf]
    %v50 = vld [vmem:[#allocation5 + $0x14] sm:$0xf]
    %v51 = vld [vmem:[#allocation5 + $0x18] sm:$0xf]
    %v52 = vld [vmem:[#allocation5 + $0x1c] sm:$0xf]
    %v53 = vld [vmem:[#allocation5 + $0x20] sm:$0xf]
    %v54 = vld [vmem:[#allocation5 + $0x24] sm:$0xf]
    %v55 = vld [vmem:[#allocation5 + $0x28] sm:$0xf]
    %v56 = vld [vmem:[#allocation5 + $0x2c] sm:$0xf]
    %v57 = vld [vmem:[#allocation5 + $0x30] sm:$0xf]
    %v58 = vld [vmem:[#allocation5 + $0x34] sm:$0xf]
    %v59 = vld [vmem:[#allocation5 + $0x38] sm:$0xf]
    %v60 = vld [vmem:[#allocation5 + $0x3c] sm:$0xf]
    %v61 = vld [vmem:[#allocation2] sm:$0xff]
    %v62 = vld [vmem:[#allocation2 + $0x8] sm:$0xff]
    %v63 = vld [vmem:[#allocation2 + $0x10] sm:$0xff]
    %v64 = vld [vmem:[#allocation2 + $0x18] sm:$0xff]
    %v65 = vld [vmem:[#allocation2 + $0x20] sm:$0xff]
    %v66 = vld [vmem:[#allocation2 + $0x28] sm:$0xff]
    %v67 = vld [vmem:[#allocation2 + $0x30] sm:$0xff]
    %v68 = vld [vmem:[#allocation2 + $0x38] sm:$0xff]
    %v69 = vld [vmem:[#allocation2 + $0x40] sm:$0xff]
    %v70 = vld [vmem:[#allocation2 + $0x48] sm:$0xff]
    %v71 = vld [vmem:[#allocation2 + $0x50] sm:$0xff]
    %v72 = vld [vmem:[#allocation2 + $0x58] sm:$0xff]
    %v73 = vld [vmem:[#allocation2 + $0x60] sm:$0xff]
    %v74 = vld [vmem:[#allocation2 + $0x68] sm:$0xff]
    %v75 = vld [vmem:[#allocation2 + $0x70] sm:$0xff]
    %v76 = vld [vmem:[#allocation2 + $0x78] sm:$0xff]
    %v77 = vpack.c.bf16 %v62, %v61
    %v78 = vpack.c.bf16 %v64, %v63
    %v79 = vpack.c.bf16 %v66, %v65
    %v80 = vpack.c.bf16 %v68, %v67
    %v81 = vpack.c.bf16 %v70, %v69
    %v82 = vpack.c.bf16 %v72, %v71
    %v83 = vpack.c.bf16 %v74, %v73
    %v84 = vpack.c.bf16 %v76, %v75
    %v85 = vunpack.c.l.bf16 %v77
    %v86 = vunpack.c.h.bf16 %v77
    %v87 = vunpack.c.l.bf16 %v78
    %v88 = vunpack.c.h.bf16 %v78
    %v89 = vunpack.c.l.bf16 %v79
    %v90 = vunpack.c.h.bf16 %v79
    %v91 = vunpack.c.l.bf16 %v80
    %v92 = vunpack.c.h.bf16 %v80
    %v93 = vunpack.c.l.bf16 %v81
    %v94 = vunpack.c.h.bf16 %v81
    %v95 = vunpack.c.l.bf16 %v82
    %v96 = vunpack.c.h.bf16 %v82
    %v97 = vunpack.c.l.bf16 %v83
    %v98 = vunpack.c.h.bf16 %v83
    %v99 = vunpack.c.l.bf16 %v84
    %v100 = vunpack.c.h.bf16 %v84
    %v101 = vsub.f32 %v61, %v85
    %v102 = vsub.f32 %v62, %v86
    %v103 = vsub.f32 %v63, %v87
    %v104 = vsub.f32 %v64, %v88
    %v105 = vsub.f32 %v65, %v89
    %v106 = vsub.f32 %v66, %v90
    %v107 = vsub.f32 %v67, %v91
    %v108 = vsub.f32 %v68, %v92
    %v109 = vsub.f32 %v69, %v93
    %v110 = vsub.f32 %v70, %v94
    %v111 = vsub.f32 %v71, %v95
    %v112 = vsub.f32 %v72, %v96
    %v113 = vsub.f32 %v73, %v97
    %v114 = vsub.f32 %v74, %v98
    %v115 = vsub.f32 %v75, %v99
    %v116 = vsub.f32 %v76, %v100
    %v117 = vpack.c.bf16 %v102, %v101
    %v118 = vpack.c.bf16 %v104, %v103
    %v119 = vpack.c.bf16 %v106, %v105
    %v120 = vpack.c.bf16 %v108, %v107
    %v121 = vpack.c.bf16 %v110, %v109
    %v122 = vpack.c.bf16 %v112, %v111
    %v123 = vpack.c.bf16 %v114, %v113
    %v124 = vpack.c.bf16 %v116, %v115
    %v141 = vunpack.c.l.b16 %v45
    %v142 = vunpack.c.l.b16 %v46
    %v143 = vunpack.c.l.b16 %v47
    %v144 = vunpack.c.l.b16 %v48
    %v145 = vunpack.c.l.b16 %v49
    %v146 = vunpack.c.l.b16 %v50
    %v147 = vunpack.c.l.b16 %v51
    %v148 = vunpack.c.l.b16 %v52
    %v149 = vunpack.c.l.b16 %v53
    %v150 = vunpack.c.l.b16 %v54
    %v151 = vunpack.c.l.b16 %v55
    %v152 = vunpack.c.l.b16 %v56
    %v153 = vunpack.c.l.b16 %v57
    %v154 = vunpack.c.l.b16 %v58
    %v155 = vunpack.c.l.b16 %v59
    %v156 = vunpack.c.l.b16 %v60
    %v157 = vpack.c.b16 %v142, %v141
    %v158 = vpack.c.b16 %v144, %v143
    %v159 = vpack.c.b16 %v146, %v145
    %v160 = vpack.c.b16 %v148, %v147
    %v161 = vpack.c.b16 %v150, %v149
    %v162 = vpack.c.b16 %v152, %v151
    %v163 = vpack.c.b16 %v154, %v153
    %v164 = vpack.c.b16 %v156, %v155
    %173 = vmatprep.subr.bf16.mxu0 0
    %174 = vmatpush1.bf16.msra.mxu0 %v157
    %175 = vmatprep.subr.bf16.mxu0 0
    %176 = vmatpush1.bf16.msra.mxu0 %v158
    %177 = vmatprep.subr.bf16.mxu0 0
    %178 = vmatpush1.bf16.msra.mxu0 %v159
    %179 = vmatprep.subr.bf16.mxu0 0
    %180 = vmatpush1.bf16.msra.mxu0 %v160
    %181 = vmatprep.subr.bf16.mxu0 0
    %182 = vmatpush1.bf16.msra.mxu0 %v161
    %183 = vmatprep.subr.bf16.mxu0 0
    %184 = vmatpush1.bf16.msra.mxu0 %v162
    %185 = vmatprep.subr.bf16.mxu0 0
    %186 = vmatpush1.bf16.msra.mxu0 %v163
    %187 = vmatprep.subr.bf16.mxu0 0
    %188 = vmatpush1.bf16.msra.mxu0 %v164
    %189 = vmatprep.subr.bf16.mxu0 0
    %190 = vmatpush1.bf16.msra.mxu0 0
    %191 = vmatprep.subr.bf16.mxu0 0
    %192 = vmatpush1.bf16.msra.mxu0 0
    %193 = vmatprep.subr.bf16.mxu0 0
    %194 = vmatpush1.bf16.msra.mxu0 0
    %195 = vmatprep.subr.bf16.mxu0 0
    %196 = vmatpush1.bf16.msra.mxu0 0
    %197 = vmatprep.subr.bf16.mxu0 0
    %198 = vmatpush1.bf16.msra.mxu0 0
    %199 = vmatprep.subr.bf16.mxu0 0
    %200 = vmatpush1.bf16.msra.mxu0 0
    %201 = vmatprep.subr.bf16.mxu0 0
    %202 = vmatpush1.bf16.msra.mxu0 0
    %203 = vmatprep.subr.bf16.mxu0 0
    %204 = vmatpush1.bf16.msra.mxu0 0
    %205 = vmatprep.mubr.bf16.mxu0 0
    %206 = vmatmul.mubr.bf16.gmra.mrb[0].mxu0 %v117
    %v207 = vpop.f32.mrb[0].mxu0
    %v208 = vadd.f32 0.0, %v207
    %v209 = vpop.f32.mrb[0].mxu0
    %v210 = vpop.f32.mrb[0].mxu0
    %v211 = vadd.f32 0.0, %v210
    %v212 = vpop.f32.mrb[0].mxu0
    %213 = vmatprep.mubr.bf16.mxu0 0
    %214 = vmatmul.mubr.bf16.gmra.mrb[0].mxu0 %v118
    %v215 = vpop.f32.mrb[0].mxu0
    %v216 = vadd.f32 0.0, %v215
    %v217 = vpop.f32.mrb[0].mxu0
    %v218 = vpop.f32.mrb[0].mxu0
    %v219 = vadd.f32 0.0, %v218
    %v220 = vpop.f32.mrb[0].mxu0
    %221 = vmatprep.mubr.bf16.mxu0 0
    %222 = vmatmul.mubr.bf16.gmra.mrb[0].mxu0 %v119
    %v223 = vpop.f32.mrb[0].mxu0
    %v224 = vadd.f32 0.0, %v223
    %v225 = vpop.f32.mrb[0].mxu0
    %v226 = vpop.f32.mrb[0].mxu0
    %v227 = vadd.f32 0.0, %v226
    %v228 = vpop.f32.mrb[0].mxu0
    %229 = vmatprep.mubr.bf16.mxu0 0
    %230 = vmatmul.mubr.bf16.gmra.mrb[0].mxu0 %v120
    %v231 = vpop.f32.mrb[0].mxu0
    %v232 = vadd.f32 0.0, %v231
    %v233 = vpop.f32.mrb[0].mxu0
    %v234 = vpop.f32.mrb[0].mxu0
    %v235 = vadd.f32 0.0, %v234
    %v236 = vpop.f32.mrb[0].mxu0
    %237 = vmatprep.mubr.bf16.mxu0 0
    %238 = vmatmul.mubr.bf16.gmra.mrb[0].mxu0 %v121
    %v239 = vpop.f32.mrb[0].mxu0
    %v240 = vadd.f32 0.0, %v239
    %v241 = vpop.f32.mrb[0].mxu0
    %v242 = vpop.f32.mrb[0].mxu0
    %v243 = vadd.f32 0.0, %v242
    %v244 = vpop.f32.mrb[0].mxu0
    %245 = vmatprep.mubr.bf16.mxu0 0
    %246 = vmatmul.mubr.bf16.gmra.mrb[0].mxu0 %v122
    %v247 = vpop.f32.mrb[0].mxu0
    %v248 = vadd.f32 0.0, %v247
    %v249 = vpop.f32.mrb[0].mxu0
    %v250 = vpop.f32.mrb[0].mxu0
    %v251 = vadd.f32 0.0, %v250
    %v252 = vpop.f32.mrb[0].mxu0
    %253 = vmatprep.mubr.bf16.mxu0 0
    %254 = vmatmul.mubr.bf16.gmra.mrb[0].mxu0 %v123
    %v255 = vpop.f32.mrb[0].mxu0
    %v256 = vadd.f32 0.0, %v255
    %v257 = vpop.f32.mrb[0].mxu0
    %v258 = vpop.f32.mrb[0].mxu0
    %v259 = vadd.f32 0.0, %v258
    %v260 = vpop.f32.mrb[0].mxu0
    %261 = vmatprep.mubr.bf16.mxu0 0
    %262 = vmatmul.mubr.bf16.gmra.mrb[0].mxu0 %v124
    %v263 = vpop.f32.mrb[0].mxu0
    %v264 = vadd.f32 0.0, %v263
    %v265 = vpop.f32.mrb[0].mxu0
    %v266 = vpop.f32.mrb[0].mxu0
    %v267 = vadd.f32 0.0, %v266
    %v268 = vpop.f32.mrb[0].mxu0
    %269 = vdwg.mxu0
    %270 = vmatprep.subr.bf16.mxu0 0
    %271 = vmatpush1.bf16.msra.mxu0 %v157
    %272 = vmatprep.subr.bf16.mxu0 0
    %273 = vmatpush1.bf16.msra.mxu0 %v158
    %274 = vmatprep.subr.bf16.mxu0 0
    %275 = vmatpush1.bf16.msra.mxu0 %v159
    %276 = vmatprep.subr.bf16.mxu0 0
    %277 = vmatpush1.bf16.msra.mxu0 %v160
    %278 = vmatprep.subr.bf16.mxu0 0
    %279 = vmatpush1.bf16.msra.mxu0 %v161
    %280 = vmatprep.subr.bf16.mxu0 0
    %281 = vmatpush1.bf16.msra.mxu0 %v162
    %282 = vmatprep.subr.bf16.mxu0 0
    %283 = vmatpush1.bf16.msra.mxu0 %v163
    %284 = vmatprep.subr.bf16.mxu0 0
    %285 = vmatpush1.bf16.msra.mxu0 %v164
    %286 = vmatprep.subr.bf16.mxu0 0
    %287 = vmatpush1.bf16.msra.mxu0 0
    %288 = vmatprep.subr.bf16.mxu0 0
    %289 = vmatpush1.bf16.msra.mxu0 0
    %290 = vmatprep.subr.bf16.mxu0 0
    %291 = vmatpush1.bf16.msra.mxu0 0
    %292 = vmatprep.subr.bf16.mxu0 0
    %293 = vmatpush1.bf16.msra.mxu0 0
    %294 = vmatprep.subr.bf16.mxu0 0
    %295 = vmatpush1.bf16.msra.mxu0 0
    %296 = vmatprep.subr.bf16.mxu0 0
    %297 = vmatpush1.bf16.msra.mxu0 0
    %298 = vmatprep.subr.bf16.mxu0 0
    %299 = vmatpush1.bf16.msra.mxu0 0
    %300 = vmatprep.subr.bf16.mxu0 0
    %301 = vmatpush1.bf16.msra.mxu0 0
    %302 = vmatprep.mubr.bf16.mxu0 0
    %303 = vmatmul.mubr.bf16.gmra.mrb[0].mxu0 %v77
    %v304 = vpop.f32.mrb[0].mxu0
    %v305 = vadd.f32 %v208, %v304
    %v306 = vpop.f32.mrb[0].mxu0
    %v307 = vpop.f32.mrb[0].mxu0
    %v308 = vadd.f32 %v211, %v307
    %v309 = vpop.f32.mrb[0].mxu0
    %310 = vmatprep.mubr.bf16.mxu0 0
    %311 = vmatmul.mubr.bf16.gmra.mrb[0].mxu0 %v78
    %v312 = vpop.f32.mrb[0].mxu0
    %v313 = vadd.f32 %v216, %v312
    %v314 = vpop.f32.mrb[0].mxu0
    %v315 = vpop.f32.mrb[0].mxu0
    %v316 = vadd.f32 %v219, %v315
    %v317 = vpop.f32.mrb[0].mxu0
    %318 = vmatprep.mubr.bf16.mxu0 0
    %319 = vmatmul.mubr.bf16.gmra.mrb[0].mxu0 %v79
    %v320 = vpop.f32.mrb[0].mxu0
    %v321 = vadd.f32 %v224, %v320
    %v322 = vpop.f32.mrb[0].mxu0
    %v323 = vpop.f32.mrb[0].mxu0
    %v324 = vadd.f32 %v227, %v323
    %v325 = vpop.f32.mrb[0].mxu0
    %326 = vmatprep.mubr.bf16.mxu0 0
    %327 = vmatmul.mubr.bf16.gmra.mrb[0].mxu0 %v80
    %v328 = vpop.f32.mrb[0].mxu0
    %v329 = vadd.f32 %v232, %v328
    %v330 = vpop.f32.mrb[0].mxu0
    %v331 = vpop.f32.mrb[0].mxu0
    %v332 = vadd.f32 %v235, %v331
    %v333 = vpop.f32.mrb[0].mxu0
    %334 = vmatprep.mubr.bf16.mxu0 0
    %335 = vmatmul.mubr.bf16.gmra.mrb[0].mxu0 %v81
    %v336 = vpop.f32.mrb[0].mxu0
    %v337 = vadd.f32 %v240, %v336
    %v338 = vpop.f32.mrb[0].mxu0
    %v339 = vpop.f32.mrb[0].mxu0
    %v340 = vadd.f32 %v243, %v339
    %v341 = vpop.f32.mrb[0].mxu0
    %342 = vmatprep.mubr.bf16.mxu0 0
    %343 = vmatmul.mubr.bf16.gmra.mrb[0].mxu0 %v82
    %v344 = vpop.f32.mrb[0].mxu0
    %v345 = vadd.f32 %v248, %v344
    %v346 = vpop.f32.mrb[0].mxu0
    %v347 = vpop.f32.mrb[0].mxu0
    %v348 = vadd.f32 %v251, %v347
    %v349 = vpop.f32.mrb[0].mxu0
    %350 = vmatprep.mubr.bf16.mxu0 0
    %351 = vmatmul.mubr.bf16.gmra.mrb[0].mxu0 %v83
    %v352 = vpop.f32.mrb[0].mxu0
    %v353 = vadd.f32 %v256, %v352
    %v354 = vpop.f32.mrb[0].mxu0
    %v355 = vpop.f32.mrb[0].mxu0
    %v356 = vadd.f32 %v259, %v355
    %v357 = vpop.f32.mrb[0].mxu0
    %358 = vmatprep.mubr.bf16.mxu0 0
    %359 = vmatmul.mubr.bf16.gmra.mrb[0].mxu0 %v84
    %v360 = vpop.f32.mrb[0].mxu0
    %v361 = vadd.f32 %v264, %v360
    %v362 = vpop.f32.mrb[0].mxu0
    %v363 = vpop.f32.mrb[0].mxu0
    %v364 = vadd.f32 %v267, %v363
    %v365 = vpop.f32.mrb[0].mxu0
    %366 = vdwg.mxu0
    %v367 = vmul.f32 %v61, %v61
    %v368 = vmul.f32 %v62, %v62
    %v369 = vmul.f32 %v63, %v63
    %v370 = vmul.f32 %v64, %v64
    %v371 = vmul.f32 %v65, %v65
    %v372 = vmul.f32 %v66, %v66
    %v373 = vmul.f32 %v67, %v67
    %v374 = vmul.f32 %v68, %v68
    %v375 = vmul.f32 %v69, %v69
    %v376 = vmul.f32 %v70, %v70
    %v377 = vmul.f32 %v71, %v71
    %v378 = vmul.f32 %v72, %v72
    %v379 = vmul.f32 %v73, %v73
    %v380 = vmul.f32 %v74, %v74
    %v381 = vmul.f32 %v75, %v75
    %v382 = vmul.f32 %v76, %v76
    %v383 = vpack.c.bf16 %v368, %v367
    %v384 = vpack.c.bf16 %v370, %v369
    %v385 = vpack.c.bf16 %v372, %v371
    %v386 = vpack.c.bf16 %v374, %v373
    %v387 = vpack.c.bf16 %v376, %v375
    %v388 = vpack.c.bf16 %v378, %v377
    %v389 = vpack.c.bf16 %v380, %v379
    %v390 = vpack.c.bf16 %v382, %v381
    %v391 = vunpack.c.l.bf16 %v383
    %v392 = vunpack.c.h.bf16 %v383
    %v393 = vunpack.c.l.bf16 %v384
    %v394 = vunpack.c.h.bf16 %v384
    %v395 = vunpack.c.l.bf16 %v385
    %v396 = vunpack.c.h.bf16 %v385
    %v397 = vunpack.c.l.bf16 %v386
    %v398 = vunpack.c.h.bf16 %v386
    %v399 = vunpack.c.l.bf16 %v387
    %v400 = vunpack.c.h.bf16 %v387
    %v401 = vunpack.c.l.bf16 %v388
    %v402 = vunpack.c.h.bf16 %v388
    %v403 = vunpack.c.l.bf16 %v389
    %v404 = vunpack.c.h.bf16 %v389
    %v405 = vunpack.c.l.bf16 %v390
    %v406 = vunpack.c.h.bf16 %v390
    %v407 = vsub.f32 %v367, %v391
    %v408 = vsub.f32 %v368, %v392
    %v409 = vsub.f32 %v369, %v393
    %v410 = vsub.f32 %v370, %v394
    %v411 = vsub.f32 %v371, %v395
    %v412 = vsub.f32 %v372, %v396
    %v413 = vsub.f32 %v373, %v397
    %v414 = vsub.f32 %v374, %v398
    %v415 = vsub.f32 %v375, %v399
    %v416 = vsub.f32 %v376, %v400
    %v417 = vsub.f32 %v377, %v401
    %v418 = vsub.f32 %v378, %v402
    %v419 = vsub.f32 %v379, %v403
    %v420 = vsub.f32 %v380, %v404
    %v421 = vsub.f32 %v381, %v405
    %v422 = vsub.f32 %v382, %v406
    %v423 = vpack.c.bf16 %v408, %v407
    %v424 = vpack.c.bf16 %v410, %v409
    %v425 = vpack.c.bf16 %v412, %v411
    %v426 = vpack.c.bf16 %v414, %v413
    %v427 = vpack.c.bf16 %v416, %v415
    %v428 = vpack.c.bf16 %v418, %v417
    %v429 = vpack.c.bf16 %v420, %v419
    %v430 = vpack.c.bf16 %v422, %v421
    %431 = vmatprep.subr.bf16.mxu0 0
    %432 = vmatpush1.bf16.msra.mxu0 %v157
    %433 = vmatprep.subr.bf16.mxu0 0
    %434 = vmatpush1.bf16.msra.mxu0 %v158
    %435 = vmatprep.subr.bf16.mxu0 0
    %436 = vmatpush1.bf16.msra.mxu0 %v159
    %437 = vmatprep.subr.bf16.mxu0 0
    %438 = vmatpush1.bf16.msra.mxu0 %v160
    %439 = vmatprep.subr.bf16.mxu0 0
    %440 = vmatpush1.bf16.msra.mxu0 %v161
    %441 = vmatprep.subr.bf16.mxu0 0
    %442 = vmatpush1.bf16.msra.mxu0 %v162
    %443 = vmatprep.subr.bf16.mxu0 0
    %444 = vmatpush1.bf16.msra.mxu0 %v163
    %445 = vmatprep.subr.bf16.mxu0 0
    %446 = vmatpush1.bf16.msra.mxu0 %v164
    %447 = vmatprep.subr.bf16.mxu0 0
    %448 = vmatpush1.bf16.msra.mxu0 0
    %449 = vmatprep.subr.bf16.mxu0 0
    %450 = vmatpush1.bf16.msra.mxu0 0
    %451 = vmatprep.subr.bf16.mxu0 0
    %452 = vmatpush1.bf16.msra.mxu0 0
    %453 = vmatprep.subr.bf16.mxu0 0
    %454 = vmatpush1.bf16.msra.mxu0 0
    %455 = vmatprep.subr.bf16.mxu0 0
    %456 = vmatpush1.bf16.msra.mxu0 0
    %457 = vmatprep.subr.bf16.mxu0 0
    %458 = vmatpush1.bf16.msra.mxu0 0
    %459 = vmatprep.subr.bf16.mxu0 0
    %460 = vmatpush1.bf16.msra.mxu0 0
    %461 = vmatprep.subr.bf16.mxu0 0
    %462 = vmatpush1.bf16.msra.mxu0 0
    %463 = vmatprep.mubr.bf16.mxu0 0
    %464 = vmatmul.mubr.bf16.gmra.mrb[0].mxu0 %v423
    %v465 = vpop.f32.mrb[0].mxu0
    %v466 = vadd.f32 0.0, %v465
    %v467 = vpop.f32.mrb[0].mxu0
    %v468 = vpop.f32.mrb[0].mxu0
    %v469 = vadd.f32 0.0, %v468
    %v470 = vpop.f32.mrb[0].mxu0
    %471 = vmatprep.mubr.bf16.mxu0 0
    %472 = vmatmul.mubr.bf16.gmra.mrb[0].mxu0 %v424
    %v473 = vpop.f32.mrb[0].mxu0
    %v474 = vadd.f32 0.0, %v473
    %v475 = vpop.f32.mrb[0].mxu0
    %v476 = vpop.f32.mrb[0].mxu0
    %v477 = vadd.f32 0.0, %v476
    %v478 = vpop.f32.mrb[0].mxu0
    %479 = vmatprep.mubr.bf16.mxu0 0
    %480 = vmatmul.mubr.bf16.gmra.mrb[0].mxu0 %v425
    %v481 = vpop.f32.mrb[0].mxu0
    %v482 = vadd.f32 0.0, %v481
    %v483 = vpop.f32.mrb[0].mxu0
    %v484 = vpop.f32.mrb[0].mxu0
    %v485 = vadd.f32 0.0, %v484
    %v486 = vpop.f32.mrb[0].mxu0
    %487 = vmatprep.mubr.bf16.mxu0 0
    %488 = vmatmul.mubr.bf16.gmra.mrb[0].mxu0 %v426
    %v489 = vpop.f32.mrb[0].mxu0
    %v490 = vadd.f32 0.0, %v489
    %v491 = vpop.f32.mrb[0].mxu0
    %v492 = vpop.f32.mrb[0].mxu0
    %v493 = vadd.f32 0.0, %v492
    %v494 = vpop.f32.mrb[0].mxu0
    %495 = vmatprep.mubr.bf16.mxu0 0
    %496 = vmatmul.mubr.bf16.gmra.mrb[0].mxu0 %v427
    %v497 = vpop.f32.mrb[0].mxu0
    %v498 = vadd.f32 0.0, %v497
    %v499 = vpop.f32.mrb[0].mxu0
    %v500 = vpop.f32.mrb[0].mxu0
    %v501 = vadd.f32 0.0, %v500
    %v502 = vpop.f32.mrb[0].mxu0
    %503 = vmatprep.mubr.bf16.mxu0 0
    %504 = vmatmul.mubr.bf16.gmra.mrb[0].mxu0 %v428
    %v505 = vpop.f32.mrb[0].mxu0
    %v506 = vadd.f32 0.0, %v505
    %v507 = vpop.f32.mrb[0].mxu0
    %v508 = vpop.f32.mrb[0].mxu0
    %v509 = vadd.f32 0.0, %v508
    %v510 = vpop.f32.mrb[0].mxu0
    %511 = vmatprep.mubr.bf16.mxu0 0
    %512 = vmatmul.mubr.bf16.gmra.mrb[0].mxu0 %v429
    %v513 = vpop.f32.mrb[0].mxu0
    %v514 = vadd.f32 0.0, %v513
    %v515 = vpop.f32.mrb[0].mxu0
    %v516 = vpop.f32.mrb[0].mxu0
    %v517 = vadd.f32 0.0, %v516
    %v518 = vpop.f32.mrb[0].mxu0
    %519 = vmatprep.mubr.bf16.mxu0 0
    %520 = vmatmul.mubr.bf16.gmra.mrb[0].mxu0 %v430
    %v521 = vpop.f32.mrb[0].mxu0
    %v522 = vadd.f32 0.0, %v521
    %v523 = vpop.f32.mrb[0].mxu0
    %v524 = vpop.f32.mrb[0].mxu0
    %v525 = vadd.f32 0.0, %v524
    %v526 = vpop.f32.mrb[0].mxu0
    %527 = vdwg.mxu0
    %528 = vmatprep.subr.bf16.mxu0 0
    %529 = vmatpush1.bf16.msra.mxu0 %v157
    %530 = vmatprep.subr.bf16.mxu0 0
    %531 = vmatpush1.bf16.msra.mxu0 %v158
    %532 = vmatprep.subr.bf16.mxu0 0
    %533 = vmatpush1.bf16.msra.mxu0 %v159
    %534 = vmatprep.subr.bf16.mxu0 0
    %535 = vmatpush1.bf16.msra.mxu0 %v160
    %536 = vmatprep.subr.bf16.mxu0 0
    %537 = vmatpush1.bf16.msra.mxu0 %v161
    %538 = vmatprep.subr.bf16.mxu0 0
    %539 = vmatpush1.bf16.msra.mxu0 %v162
    %540 = vmatprep.subr.bf16.mxu0 0
    %541 = vmatpush1.bf16.msra.mxu0 %v163
    %542 = vmatprep.subr.bf16.mxu0 0
    %543 = vmatpush1.bf16.msra.mxu0 %v164
    %544 = vmatprep.subr.bf16.mxu0 0
    %545 = vmatpush1.bf16.msra.mxu0 0
    %546 = vmatprep.subr.bf16.mxu0 0
    %547 = vmatpush1.bf16.msra.mxu0 0
    %548 = vmatprep.subr.bf16.mxu0 0
    %549 = vmatpush1.bf16.msra.mxu0 0
    %550 = vmatprep.subr.bf16.mxu0 0
    %551 = vmatpush1.bf16.msra.mxu0 0
    %552 = vmatprep.subr.bf16.mxu0 0
    %553 = vmatpush1.bf16.msra.mxu0 0
    %554 = vmatprep.subr.bf16.mxu0 0
    %555 = vmatpush1.bf16.msra.mxu0 0
    %556 = vmatprep.subr.bf16.mxu0 0
    %557 = vmatpush1.bf16.msra.mxu0 0
    %558 = vmatprep.subr.bf16.mxu0 0
    %559 = vmatpush1.bf16.msra.mxu0 0
    %560 = vmatprep.mubr.bf16.mxu0 0
    %561 = vmatmul.mubr.bf16.gmra.mrb[0].mxu0 %v383
    %v562 = vpop.f32.mrb[0].mxu0
    %v563 = vadd.f32 %v466, %v562
    %v564 = vpop.f32.mrb[0].mxu0
    %v565 = vpop.f32.mrb[0].mxu0
    %v566 = vadd.f32 %v469, %v565
    %v567 = vpop.f32.mrb[0].mxu0
    %568 = vmatprep.mubr.bf16.mxu0 0
    %569 = vmatmul.mubr.bf16.gmra.mrb[0].mxu0 %v384
    %v570 = vpop.f32.mrb[0].mxu0
    %v571 = vadd.f32 %v474, %v570
    %v572 = vpop.f32.mrb[0].mxu0
    %v573 = vpop.f32.mrb[0].mxu0
    %v574 = vadd.f32 %v477, %v573
    %v575 = vpop.f32.mrb[0].mxu0
    %576 = vmatprep.mubr.bf16.mxu0 0
    %577 = vmatmul.mubr.bf16.gmra.mrb[0].mxu0 %v385
    %v578 = vpop.f32.mrb[0].mxu0
    %v579 = vadd.f32 %v482, %v578
    %v580 = vpop.f32.mrb[0].mxu0
    %v581 = vpop.f32.mrb[0].mxu0
    %v582 = vadd.f32 %v485, %v581
    %v583 = vpop.f32.mrb[0].mxu0
    %584 = vmatprep.mubr.bf16.mxu0 0
    %585 = vmatmul.mubr.bf16.gmra.mrb[0].mxu0 %v386
    %v586 = vpop.f32.mrb[0].mxu0
    %v587 = vadd.f32 %v490, %v586
    %v588 = vpop.f32.mrb[0].mxu0
    %v589 = vpop.f32.mrb[0].mxu0
    %v590 = vadd.f32 %v493, %v589
    %v591 = vpop.f32.mrb[0].mxu0
    %592 = vmatprep.mubr.bf16.mxu0 0
    %593 = vmatmul.mubr.bf16.gmra.mrb[0].mxu0 %v387
    %v594 = vpop.f32.mrb[0].mxu0
    %v595 = vadd.f32 %v498, %v594
    %v596 = vpop.f32.mrb[0].mxu0
    %v597 = vpop.f32.mrb[0].mxu0
    %v598 = vadd.f32 %v501, %v597
    %v599 = vpop.f32.mrb[0].mxu0
    %600 = vmatprep.mubr.bf16.mxu0 0
    %601 = vmatmul.mubr.bf16.gmra.mrb[0].mxu0 %v388
    %v602 = vpop.f32.mrb[0].mxu0
    %v603 = vadd.f32 %v506, %v602
    %v604 = vpop.f32.mrb[0].mxu0
    %v605 = vpop.f32.mrb[0].mxu0
    %v606 = vadd.f32 %v509, %v605
    %v607 = vpop.f32.mrb[0].mxu0
    %608 = vmatprep.mubr.bf16.mxu0 0
    %609 = vmatmul.mubr.bf16.gmra.mrb[0].mxu0 %v389
    %v610 = vpop.f32.mrb[0].mxu0
    %v611 = vadd.f32 %v514, %v610
    %v612 = vpop.f32.mrb[0].mxu0
    %v613 = vpop.f32.mrb[0].mxu0
    %v614 = vadd.f32 %v517, %v613
    %v615 = vpop.f32.mrb[0].mxu0
    %616 = vmatprep.mubr.bf16.mxu0 0
    %617 = vmatmul.mubr.bf16.gmra.mrb[0].mxu0 %v390
    %v618 = vpop.f32.mrb[0].mxu0
    %v619 = vadd.f32 %v522, %v618
    %v620 = vpop.f32.mrb[0].mxu0
    %v621 = vpop.f32.mrb[0].mxu0
    %v622 = vadd.f32 %v525, %v621
    %v623 = vpop.f32.mrb[0].mxu0
    %624 = vdwg.mxu0
    %v625 = vmul.f32 %v305, 0.03125
    %v626 = vmul.f32 %v308, 0.03125
    %v627 = vmul.f32 %v313, 0.03125
    %v628 = vmul.f32 %v316, 0.03125
    %v629 = vmul.f32 %v321, 0.03125
    %v630 = vmul.f32 %v324, 0.03125
    %v631 = vmul.f32 %v329, 0.03125
    %v632 = vmul.f32 %v332, 0.03125
    %v633 = vmul.f32 %v337, 0.03125
    %v634 = vmul.f32 %v340, 0.03125
    %v635 = vmul.f32 %v345, 0.03125
    %v636 = vmul.f32 %v348, 0.03125
    %v637 = vmul.f32 %v353, 0.03125
    %v638 = vmul.f32 %v356, 0.03125
    %v639 = vmul.f32 %v361, 0.03125
    %v640 = vmul.f32 %v364, 0.03125
    %v641 = vmul.f32 %v563, 0.03125
    %v642 = vmul.f32 %v566, 0.03125
    %v643 = vmul.f32 %v571, 0.03125
    %v644 = vmul.f32 %v574, 0.03125
    %v645 = vmul.f32 %v579, 0.03125
    %v646 = vmul.f32 %v582, 0.03125
    %v647 = vmul.f32 %v587, 0.03125
    %v648 = vmul.f32 %v590, 0.03125
    %v649 = vmul.f32 %v595, 0.03125
    %v650 = vmul.f32 %v598, 0.03125
    %v651 = vmul.f32 %v603, 0.03125
    %v652 = vmul.f32 %v606, 0.03125
    %v653 = vmul.f32 %v611, 0.03125
    %v654 = vmul.f32 %v614, 0.03125
    %v655 = vmul.f32 %v619, 0.03125
    %v656 = vmul.f32 %v622, 0.03125
    %v657 = vmul.f32 %v625, %v625
    %v658 = vmul.f32 %v626, %v626
    %v659 = vmul.f32 %v627, %v627
    %v660 = vmul.f32 %v628, %v628
    %v661 = vmul.f32 %v629, %v629
    %v662 = vmul.f32 %v630, %v630
    %v663 = vmul.f32 %v631, %v631
    %v664 = vmul.f32 %v632, %v632
    %v665 = vmul.f32 %v633, %v633
    %v666 = vmul.f32 %v634, %v634
    %v667 = vmul.f32 %v635, %v635
    %v668 = vmul.f32 %v636, %v636
    %v669 = vmul.f32 %v637, %v637
    %v670 = vmul.f32 %v638, %v638
    %v671 = vmul.f32 %v639, %v639
    %v672 = vmul.f32 %v640, %v640
    %v673 = vsub.f32 %v641, %v657
    %v674 = vsub.f32 %v642, %v658
    %v675 = vsub.f32 %v643, %v659
    %v676 = vsub.f32 %v644, %v660
    %v677 = vsub.f32 %v645, %v661
    %v678 = vsub.f32 %v646, %v662
    %v679 = vsub.f32 %v647, %v663
    %v680 = vsub.f32 %v648, %v664
    %v681 = vsub.f32 %v649, %v665
    %v682 = vsub.f32 %v650, %v666
    %v683 = vsub.f32 %v651, %v667
    %v684 = vsub.f32 %v652, %v668
    %v685 = vsub.f32 %v653, %v669
    %v686 = vsub.f32 %v654, %v670
    %v687 = vsub.f32 %v655, %v671
    %v688 = vsub.f32 %v656, %v672
    %v689 = vmax.f32 %v673, 0.0
    %v690 = vmax.f32 %v674, 0.0
    %v691 = vmax.f32 %v675, 0.0
    %v692 = vmax.f32 %v676, 0.0
    %v693 = vmax.f32 %v677, 0.0
    %v694 = vmax.f32 %v678, 0.0
    %v695 = vmax.f32 %v679, 0.0
    %v696 = vmax.f32 %v680, 0.0
    %v697 = vmax.f32 %v681, 0.0
    %v698 = vmax.f32 %v682, 0.0
    %v699 = vmax.f32 %v683, 0.0
    %v700 = vmax.f32 %v684, 0.0
    %v701 = vmax.f32 %v685, 0.0
    %v702 = vmax.f32 %v686, 0.0
    %v703 = vmax.f32 %v687, 0.0
    %v704 = vmax.f32 %v688, 0.0
    %v705 = vadd.f32 %v689, 1e-05
    %v706 = vadd.f32 %v690, 1e-05
    %v707 = vadd.f32 %v691, 1e-05
    %v708 = vadd.f32 %v692, 1e-05
    %v709 = vadd.f32 %v693, 1e-05
    %v710 = vadd.f32 %v694, 1e-05
    %v711 = vadd.f32 %v695, 1e-05
    %v712 = vadd.f32 %v696, 1e-05
    %v713 = vadd.f32 %v697, 1e-05
    %v714 = vadd.f32 %v698, 1e-05
    %v715 = vadd.f32 %v699, 1e-05
    %v716 = vadd.f32 %v700, 1e-05
    %v717 = vadd.f32 %v701, 1e-05
    %v718 = vadd.f32 %v702, 1e-05
    %v719 = vadd.f32 %v703, 1e-05
    %v720 = vadd.f32 %v704, 1e-05
    %v721 = vrsqrt.pop %v705
    %v722 = vrsqrt.pop %v706
    %v723 = vrsqrt.pop %v707
    %v724 = vrsqrt.pop %v708
    %v725 = vrsqrt.pop %v709
    %v726 = vrsqrt.pop %v710
    %v727 = vrsqrt.pop %v711
    %v728 = vrsqrt.pop %v712
    %v729 = vrsqrt.pop %v713
    %v730 = vrsqrt.pop %v714
    %v731 = vrsqrt.pop %v715
    %v732 = vrsqrt.pop %v716
    %v733 = vrsqrt.pop %v717
    %v734 = vrsqrt.pop %v718
    %v735 = vrsqrt.pop %v719
    %v736 = vrsqrt.pop %v720
    %v737 = vmul.f32 %v61, %v721
    %v738 = vmul.f32 %v62, %v722
    %v739 = vmul.f32 %v63, %v723
    %v740 = vmul.f32 %v64, %v724
    %v741 = vmul.f32 %v65, %v725
    %v742 = vmul.f32 %v66, %v726
    %v743 = vmul.f32 %v67, %v727
    %v744 = vmul.f32 %v68, %v728
    %v745 = vmul.f32 %v69, %v729
    %v746 = vmul.f32 %v70, %v730
    %v747 = vmul.f32 %v71, %v731
    %v748 = vmul.f32 %v72, %v732
    %v749 = vmul.f32 %v73, %v733
    %v750 = vmul.f32 %v74, %v734
    %v751 = vmul.f32 %v75, %v735
    %v752 = vmul.f32 %v76, %v736
    %v754 = vlaneseq
    %v755 = vshrl.u32 %v754, 7
    %v756 = vsub.s32 0, %v755
    %v757 = vrot.slane %v44, %v756
    %v759 = vmul.f32 %v737, %v757
    %v760 = vmul.f32 %v738, %v757
    %v761 = vmul.f32 %v739, %v757
    %v762 = vmul.f32 %v740, %v757
    %v763 = vmul.f32 %v741, %v757
    %v764 = vmul.f32 %v742, %v757
    %v765 = vmul.f32 %v743, %v757
    %v766 = vmul.f32 %v744, %v757
    %v767 = vmul.f32 %v745, %v757
    %v768 = vmul.f32 %v746, %v757
    %v769 = vmul.f32 %v747, %v757
    %v770 = vmul.f32 %v748, %v757
    %v771 = vmul.f32 %v749, %v757
    %v772 = vmul.f32 %v750, %v757
    %v773 = vmul.f32 %v751, %v757
    %v774 = vmul.f32 %v752, %v757
    %775 = vst [vmem:[#allocation7] sm:$0xff] %v759
    %776 = vst [vmem:[#allocation7 + $0x8] sm:$0xff] %v760
    %777 = vst [vmem:[#allocation7 + $0x10] sm:$0xff] %v761
    %778 = vst [vmem:[#allocation7 + $0x18] sm:$0xff] %v762
    %779 = vst [vmem:[#allocation7 + $0x20] sm:$0xff] %v763
    %780 = vst [vmem:[#allocation7 + $0x28] sm:$0xff] %v764
    %781 = vst [vmem:[#allocation7 + $0x30] sm:$0xff] %v765
    %782 = vst [vmem:[#allocation7 + $0x38] sm:$0xff] %v766
    %783 = vst [vmem:[#allocation7 + $0x40] sm:$0xff] %v767
    %784 = vst [vmem:[#allocation7 + $0x48] sm:$0xff] %v768
    %785 = vst [vmem:[#allocation7 + $0x50] sm:$0xff] %v769
    %786 = vst [vmem:[#allocation7 + $0x58] sm:$0xff] %v770
    %787 = vst [vmem:[#allocation7 + $0x60] sm:$0xff] %v771
    %788 = vst [vmem:[#allocation7 + $0x68] sm:$0xff] %v772
    %789 = vst [vmem:[#allocation7 + $0x70] sm:$0xff] %v773
    %790 = vst [vmem:[#allocation7 + $0x78] sm:$0xff] %v774
    // Predicated region
    $region22: #{tpu_custom_call.1} parent=1 // pred_check
      _
    $region23: #{tpu_custom_call.1} parent=1 // pred_check_branch
      %792 = sbr.rel (0) target = $region25
    $region24: #{tpu_custom_call.1} parent=1 // pred_region
      %s794 = ssub.s32 2048, 2048
      %795 = vsyncadd [#allocation4], %s794
      %s796 = sshll.u32 [#allocation7], 4
      %s797 = int_to_ptr.vmem [resolvable:$true] %s796
      %802 = dma.vmem_to_hbm [thread:$0]  %s797, 2048, %s3, [#allocation4], 128, 128, 8
    $region25: #{tpu_custom_call.1} parent=1 // pred_fallthru
      _
    // Predicated region
    $region26: #{tpu_custom_call.1} parent=1 // pred_check
      _
    $region27: #{tpu_custom_call.1} parent=1 // pred_check_branch
      %804 = sbr.rel (0) target = $region29
    $region28: #{tpu_custom_call.1} parent=1 // pred_region
      %805 = dma.done [#allocation4], 2048
    $region29: #{tpu_custom_call.1} parent=1 // pred_fallthru
      _
    %806 = vsyncpa [#allocation3], 1
    %807 = vsyncpa [#allocation6], 1
    %808 = vsyncpa [#allocation4], 1

</llo_original>
